<compile_context>
chip_gen: v7x
topology: tpu7x:2x2x1
jax: 0.10.0
libtpu: 0.0.40
codegen_flags: <defaults>
</compile_context>

<pallas_src>
import functools

import jax
import jax.numpy as jnp
from jax.experimental import pallas as pl
from jax.experimental.pallas import tpu as pltpu

EPS = 1e-5
_MAX_BATCH_BLOCK = 8           # max batches folded into one grid step (static unroll bound)
_TARGET_STEP_BYTES = 4 << 20   # aim for ~4 MiB of x+out HBM traffic per grid step


def _vmem_budget_bytes():
    """Per-generation scoped-VMEM budget (~96 MiB on v5e/v6e, ~48 MiB on v7x)."""
    try:
        cap = int(pltpu.get_tpu_info().vmem_capacity_bytes)
    except Exception:
        cap = 64 << 20  # conservative (v7x-sized) fallback
    return min(cap * 3 // 4, 100 << 20)


def _choose_blocks(B, C_in, C_out, N, vmem_budget):
    """Pick (batch_block, tile_n) from the VMEM budget.

    VMEM bytes per (batch row, lane column):
      pass 2: 2x double-buffered x + 2x double-buffered out + 1x f32 y temp
      pass 1: 2x double-buffered x + ~3 temporaries (mask/iota/matmul input)
    """
    vmem_per_col = 4 * max(2 * C_in + 3 * C_out, 5 * C_in)
    hbm_per_col = 4 * (C_in + C_out)

    if N % 128 == 0 or N < 128:
        n_cap = N
    else:
        n_cap = (N // 128) * 128        # cdiv grid; masked tail tile covers the rest

    def tn_for(bt):
        cap_cols = vmem_budget // (vmem_per_col * bt)
        if n_cap < 128:                 # tiny N: single full-extent block
            return n_cap if cap_cols >= n_cap else 0
        return min((cap_cols // 128) * 128, n_cap)

    bt, tn = 1, tn_for(1)
    if tn <= 0:
        raise ValueError("even a single 128-column tile does not fit the VMEM budget")

    # Fold batches while the N cap (not VMEM) is the binding constraint and the
    # per-step HBM traffic is still below target.
    for cand in range(2, min(B, _MAX_BATCH_BLOCK) + 1):
        if B % cand:
            continue
        if bt * tn * hbm_per_col >= _TARGET_STEP_BYTES:
            break
        t = tn_for(cand)
        if t < tn:                      # VMEM budget now binding -> stop growing batch
            break
        bt, tn = cand, t
    return bt, tn


def _stats_kernel(x_ref, g_ref, sx_ref, *, bt, tile_n, n_total, needs_mask):
    # x_ref: (bt, C_in, TN)   g_ref: (1, C_in, C_in)   sx_ref: (1, C_in, 1)
    # Accumulators are resident across the inner (N-tile) grid axis.
    j = pl.program_id(1)

    @pl.when(j == 0)
    def _():
        g_ref[...] = jnp.zeros_like(g_ref)
        sx_ref[...] = jnp.zeros_like(sx_ref)

    x = x_ref[...]                                       # (bt, C_in, TN) f32
    if needs_mask:
        col = jax.lax.broadcasted_iota(jnp.int32, x.shape, 2)
        x = jnp.where(col < (n_total - j * tile_n), x, 0.0)

    g_acc = jnp.zeros(g_ref.shape[1:], jnp.float32)
    sx_acc = jnp.zeros(sx_ref.shape[1:], jnp.float32)
    for b in range(bt):                                  # static unroll (bt <= 8)
        xb = x[b]                                        # (C_in, TN)
        g_acc += jax.lax.dot_general(                    # xb @ xb^T on the MXU
            xb, xb, (((1,), (1,)), ((), ())),
            preferred_element_type=jnp.float32)
        sx_acc += jnp.sum(xb, axis=1, keepdims=True)
    g_ref[0] += g_acc
    sx_ref[0] += sx_acc


def _apply_kernel(x_ref, w_ref, bias_ref, o_ref, *, bt):
    # x_ref: (bt, C_in, TN)  w_ref: (C_out, C_in) with BN scale folded in
    # bias_ref: (C_out, 1)   o_ref: (bt, C_out, TN)
    w = w_ref[...]
    bias = bias_ref[...]
    for b in range(bt):                                  # static unroll (bt <= 8)
        y = jnp.dot(w, x_ref[b], preferred_element_type=jnp.float32)  # (C_out, TN)
        o_ref[b] = jnp.maximum(y + bias, 0.0).astype(o_ref.dtype)


@functools.partial(jax.jit, static_argnames=("tile_n", "batch_block"))
def mlp_block_forward(x, weight, gamma, beta, *, tile_n=None, batch_block=None):
    """x: (B, C_in, N) f32; weight: (C_out, C_in, 1); gamma/beta: (C_out,).

    Returns (B, C_out, N) f32, matching MLPBlock.forward in training mode.
    """
    B, C_in, N = x.shape
    C_out = weight.shape[0]
    M = B * N

    vmem_budget = _vmem_budget_bytes()
    bt_auto, tn_auto = _choose_blocks(B, C_in, C_out, N, vmem_budget)
    tn = tn_auto if tile_n is None else tile_n
    bt = bt_auto if batch_block is None else batch_block
    assert B % bt == 0, "batch_block must divide B"
    assert tn == N or tn % 128 == 0, "tile_n must be N or a multiple of 128"

    n_bblocks = B // bt
    n_tiles = -(-N // tn)
    needs_mask = (N % tn) != 0
    grid = (n_bblocks, n_tiles)

    w2d = weight[:, :, 0]                                # (C_out, C_in) — no transpose needed
    x_spec = pl.BlockSpec((bt, C_in, tn), lambda i, j: (i, 0, j))

    # ---- pass 1: Gram-matrix stats sweep (per-batch-block partials) --------
    g_part, sx_part = pl.pallas_call(
        functools.partial(_stats_kernel, bt=bt, tile_n=tn, n_total=N,
                          needs_mask=needs_mask),
        out_shape=(
            jax.ShapeDtypeStruct((n_bblocks, C_in, C_in), jnp.float32),
            jax.ShapeDtypeStruct((n_bblocks, C_in, 1), jnp.float32),
        ),
        grid=grid,
        in_specs=[x_spec],
        out_specs=[
            pl.BlockSpec((1, C_in, C_in), lambda i, j: (i, 0, 0)),
            pl.BlockSpec((1, C_in, 1), lambda i, j: (i, 0, 0)),
        ],
        compiler_params=pltpu.CompilerParams(
            dimension_semantics=("parallel", "arbitrary"),   # leading axis can split across TCs
            vmem_limit_bytes=vmem_budget,
        ),
        cost_estimate=pl.CostEstimate(
            flops=2 * M * C_in * C_in + M * C_in,
            transcendentals=0,
            bytes_accessed=4 * (M * C_in + n_bblocks * C_in * (C_in + 1)),
        ),
    )(x)

    # ---- tiny wrapper math: BN stats from Gram; fold scale into W ----------
    g = jnp.sum(g_part, axis=0)                          # (C_in, C_in)
    sx = jnp.sum(sx_part, axis=0)                        # (C_in, 1)
    s = w2d @ sx                                         # sum_n y per out-channel
    mean = s / M
    ey2 = jnp.sum((w2d @ g) * w2d, axis=1, keepdims=True) / M
    # TODO(synk): E[y^2]-mean^2 in f32 can cancel for |mean| >> std; clamp keeps it sane.
    var = jnp.maximum(ey2 - mean * mean, 0.0)            # biased variance (training-mode BN)
    scale = gamma.reshape(C_out, 1) * jax.lax.rsqrt(var + EPS)
    bias = beta.reshape(C_out, 1) - mean * scale
    w_scaled = (w2d * scale).astype(x.dtype)             # fold BN scale into the weights

    # ---- pass 2: out = relu(w_scaled @ x + bias) in native (B, C_out, N) ---
    out = pl.pallas_call(
        functools.partial(_apply_kernel, bt=bt),
        out_shape=jax.ShapeDtypeStruct((B, C_out, N), x.dtype),
        grid=grid,
        in_specs=[
            x_spec,
            pl.BlockSpec((C_out, C_in), lambda i, j: (0, 0)),
            pl.BlockSpec((C_out, 1), lambda i, j: (0, 0)),
        ],
        out_specs=pl.BlockSpec((bt, C_out, tn), lambda i, j: (i, 0, j)),
        compiler_params=pltpu.CompilerParams(
            dimension_semantics=("parallel", "parallel"),
            vmem_limit_bytes=vmem_budget,
        ),
        cost_estimate=pl.CostEstimate(
            flops=2 * M * C_in * C_out + 2 * M * C_out,
            transcendentals=0,
            bytes_accessed=4 * (M * C_in + C_out * C_in + C_out + M * C_out),
        ),
    )(x, w_scaled, bias)
    return out


def _reference(x, weight, gamma, beta):
    # Pure-JAX reference (BatchNorm1d training-mode forward).
    y = jnp.einsum("bcn,oc->bon", x, weight[:, :, 0])
    mean = jnp.mean(y, axis=(0, 2), keepdims=True)
    var = jnp.mean((y - mean) ** 2, axis=(0, 2), keepdims=True)
    y_hat = (y - mean) * jax.lax.rsqrt(var + EPS)
    return jnp.maximum(y_hat * gamma[None, :, None] + beta[None, :, None], 0.0)


if __name__ == "__main__":
    key = jax.random.PRNGKey(0)
    k_x, k_w, k_g, k_b = jax.random.split(key, 4)

    C_in, C_out = 4, 32
    weight = 0.1 * jax.random.normal(k_w, (C_out, C_in, 1), dtype=jnp.float32)
    gamma = 1.0 + 0.05 * jax.random.normal(k_g, (C_out,), dtype=jnp.float32)
    beta = 0.05 * jax.random.normal(k_b, (C_out,), dtype=jnp.float32)

    # Test 1: tiny, non-128-aligned N (full-extent block + auto batch blocking).
    B, N = 2, 16
    x = jax.random.normal(k_x, (B, C_in, N), dtype=jnp.float32)
    out = jax.block_until_ready(mlp_block_forward(x, weight, gamma, beta))
    ref = _reference(x, weight, gamma, beta)
    assert out.shape == (B, C_out, N)
    assert jnp.allclose(out, ref, atol=1e-4, rtol=1e-4), "mismatch vs reference (tiny)"

    # Test 2: 128-aligned N, forced multi-tile + batch-blocked grid
    # (exercises pipelining, cross-tile stats accumulation, partial reduction).
    B2, N2 = 4, 384
    x2 = jax.random.normal(k_x, (B2, C_in, N2), dtype=jnp.float32)
    out2 = jax.block_until_ready(
        mlp_block_forward(x2, weight, gamma, beta, tile_n=128, batch_block=2))
    ref2 = _reference(x2, weight, gamma, beta)
    assert out2.shape == (B2, C_out, N2)
    assert jnp.allclose(out2, ref2, atol=1e-4, rtol=1e-4), "mismatch vs reference (tiled)"

    # Test 3: non-128-aligned N > 128 (cdiv grid + masked tail tile in stats).
    N3 = 200
    x3 = jax.random.normal(k_x, (B, C_in, N3), dtype=jnp.float32)
    out3 = jax.block_until_ready(
        mlp_block_forward(x3, weight, gamma, beta, tile_n=128, batch_block=1))
    ref3 = _reference(x3, weight, gamma, beta)
    assert out3.shape == (B, C_out, N3)
    assert jnp.allclose(out3, ref3, atol=1e-4, rtol=1e-4), "mismatch vs reference (masked tail)"

    # TODO(synk): nn.BatchNorm1d running_mean/running_var bookkeeping is not
    # emitted (it does not affect the training-mode forward output).
    print("KERNEL_OK")
</pallas_src>

<mosaic_0001>
module attributes {stable_mosaic.version = 11 : i64} {
  func.func @_stats_kernel(%arg0: i32, %arg1: i32, %arg2: memref<2x4x16xf32, #tpu.memory_space<vmem>>, %arg3: memref<1x4x4xf32, #tpu.memory_space<vmem>>, %arg4: memref<1x4x1xf32, #tpu.memory_space<vmem>>) attributes {dimension_semantics = [#tpu.dimension_semantics<parallel>, #tpu.dimension_semantics<arbitrary>], iteration_bounds = array<i64: 1, 1>, scalar_prefetch = 0 : i64, scratch_operands = 0 : i64, tpu.core_type = #tpu.core_type<tc>, window_params = [{transform_indices = @transform_0, window_bounds = array<i64: 2, 4, 16>}, {transform_indices = @transform_1, window_bounds = array<i64: 1, 4, 4>}, {transform_indices = @transform_2, window_bounds = array<i64: 1, 4, 1>}]} {
    %c0_i32 = arith.constant 0 : i32
    %0 = arith.cmpi eq, %arg1, %c0_i32 : i32
    %1 = arith.extui %0 : i1 to i32
    %c0_i32_0 = arith.constant 0 : i32
    %2 = arith.cmpi ne, %1, %c0_i32_0 : i32
    scf.if %2 {
      %cst_20 = arith.constant 0.000000e+00 : f32
      %32 = vector.broadcast %cst_20 : f32 to vector<1x4x4xf32>
      %c0_21 = arith.constant 0 : index
      %c0_22 = arith.constant 0 : index
      %c0_23 = arith.constant 0 : index
      %33 = vector.load %arg3[%c0_21, %c0_22, %c0_23] : memref<1x4x4xf32, #tpu.memory_space<vmem>>, vector<1x4x4xf32>
      tpu.vector_store %arg3[%c0_21, %c0_22, %c0_23], %32 {strides = array<i32>} : memref<1x4x4xf32, #tpu.memory_space<vmem>>, vector<1x4x4xf32>,
      %cst_24 = arith.constant 0.000000e+00 : f32
      %34 = vector.broadcast %cst_24 : f32 to vector<1x4x1xf32>
      %c0_25 = arith.constant 0 : index
      %c0_26 = arith.constant 0 : index
      %c0_27 = arith.constant 0 : index
      %35 = vector.load %arg4[%c0_25, %c0_26, %c0_27] : memref<1x4x1xf32, #tpu.memory_space<vmem>>, vector<1x4x1xf32>
      tpu.vector_store %arg4[%c0_25, %c0_26, %c0_27], %34 {strides = array<i32>} : memref<1x4x1xf32, #tpu.memory_space<vmem>>, vector<1x4x1xf32>,
    } else {
    }
    %c0 = arith.constant 0 : index
    %c0_1 = arith.constant 0 : index
    %c0_2 = arith.constant 0 : index
    %3 = vector.load %arg2[%c0, %c0_1, %c0_2] : memref<2x4x16xf32, #tpu.memory_space<vmem>>, vector<2x4x16xf32>
    %cst = arith.constant 0.000000e+00 : f32
    %4 = vector.broadcast %cst : f32 to vector<4x4xf32>
    %cst_3 = arith.constant 0.000000e+00 : f32
    %5 = vector.broadcast %cst_3 : f32 to vector<4x1xf32>
    %6 = vector.extract_strided_slice %3 {offsets = [0, 0, 0], sizes = [1, 4, 16], strides = [1, 1, 1]} : vector<2x4x16xf32> to vector<1x4x16xf32>
    %7 = vector.shape_cast %6 : vector<1x4x16xf32> to vector<4x16xf32>
    %cst_4 = arith.constant dense<0.000000e+00> : vector<4x4xf32>
    %8 = tpu.matmul %7, %7, %cst_4 {dimension_numbers = #tpu.dot_dimension_numbers<[1], [1], [0], [0], [0, 0, 1, 0], [], []>} : vector<4x16xf32>, vector<4x16xf32>, vector<4x4xf32> -> vector<4x4xf32>
    %9 = arith.addf %4, %8 : vector<4x4xf32>
    %cst_5 = arith.constant dense<0.000000e+00> : vector<4xf32>
    %10 = vector.multi_reduction <add>, %7, %cst_5 [1] : vector<4x16xf32> to vector<4xf32>
    %11 = vector.shape_cast %10 : vector<4xf32> to vector<4x1xf32>
    %12 = arith.addf %5, %11 : vector<4x1xf32>
    %13 = vector.extract_strided_slice %3 {offsets = [1, 0, 0], sizes = [1, 4, 16], strides = [1, 1, 1]} : vector<2x4x16xf32> to vector<1x4x16xf32>
    %14 = vector.shape_cast %13 : vector<1x4x16xf32> to vector<4x16xf32>
    %cst_6 = arith.constant dense<0.000000e+00> : vector<4x4xf32>
    %15 = tpu.matmul %14, %14, %cst_6 {dimension_numbers = #tpu.dot_dimension_numbers<[1], [1], [0], [0], [0, 0, 1, 0], [], []>} : vector<4x16xf32>, vector<4x16xf32>, vector<4x4xf32> -> vector<4x4xf32>
    %16 = arith.addf %9, %15 : vector<4x4xf32>
    %cst_7 = arith.constant dense<0.000000e+00> : vector<4xf32>
    %17 = vector.multi_reduction <add>, %14, %cst_7 [1] : vector<4x16xf32> to vector<4xf32>
    %18 = vector.shape_cast %17 : vector<4xf32> to vector<4x1xf32>
    %19 = arith.addf %12, %18 : vector<4x1xf32>
    %c0_8 = arith.constant 0 : index
    %c0_9 = arith.constant 0 : index
    %c0_10 = arith.constant 0 : index
    %20 = vector.load %arg3[%c0_8, %c0_9, %c0_10] : memref<1x4x4xf32, #tpu.memory_space<vmem>>, vector<1x4x4xf32>
    %21 = vector.shape_cast %20 : vector<1x4x4xf32> to vector<4x4xf32>
    %22 = arith.addf %21, %16 : vector<4x4xf32>
    %c0_11 = arith.constant 0 : index
    %c0_12 = arith.constant 0 : index
    %c0_13 = arith.constant 0 : index
    %23 = vector.load %arg3[%c0_11, %c0_12, %c0_13] : memref<1x4x4xf32, #tpu.memory_space<vmem>>, vector<1x4x4xf32>
    %24 = vector.shape_cast %23 : vector<1x4x4xf32> to vector<4x4xf32>
    %25 = vector.shape_cast %22 : vector<4x4xf32> to vector<1x4x4xf32>
    tpu.vector_store %arg3[%c0_11, %c0_12, %c0_13], %25 {strides = array<i32>} : memref<1x4x4xf32, #tpu.memory_space<vmem>>, vector<1x4x4xf32>,
    %c0_14 = arith.constant 0 : index
    %c0_15 = arith.constant 0 : index
    %c0_16 = arith.constant 0 : index
    %26 = vector.load %arg4[%c0_14, %c0_15, %c0_16] : memref<1x4x1xf32, #tpu.memory_space<vmem>>, vector<1x4x1xf32>
    %27 = vector.shape_cast %26 : vector<1x4x1xf32> to vector<4x1xf32>
    %28 = arith.addf %27, %19 : vector<4x1xf32>
    %c0_17 = arith.constant 0 : index
    %c0_18 = arith.constant 0 : index
    %c0_19 = arith.constant 0 : index
    %29 = vector.load %arg4[%c0_17, %c0_18, %c0_19] : memref<1x4x1xf32, #tpu.memory_space<vmem>>, vector<1x4x1xf32>
    %30 = vector.shape_cast %29 : vector<1x4x1xf32> to vector<4x1xf32>
    %31 = vector.shape_cast %28 : vector<4x1xf32> to vector<1x4x1xf32>
    tpu.vector_store %arg4[%c0_17, %c0_18, %c0_19], %31 {strides = array<i32>} : memref<1x4x1xf32, #tpu.memory_space<vmem>>, vector<1x4x1xf32>,
    return
  }
  func.func @transform_0(%arg0: i32, %arg1: i32) -> (i32, i32, i32) {
    %c0_i32 = arith.constant 0 : i32
    %c0_i32_0 = arith.constant 0 : i32
    return %arg0, %c0_i32, %arg1 : i32, i32, i32
  }
  func.func @transform_1(%arg0: i32, %arg1: i32) -> (i32, i32, i32) {
    %c0_i32 = arith.constant 0 : i32
    %c0_i32_0 = arith.constant 0 : i32
    %c0_i32_1 = arith.constant 0 : i32
    return %arg0, %c0_i32, %c0_i32_0 : i32, i32, i32
  }
  func.func @transform_2(%arg0: i32, %arg1: i32) -> (i32, i32, i32) {
    %c0_i32 = arith.constant 0 : i32
    %c0_i32_0 = arith.constant 0 : i32
    %c0_i32_1 = arith.constant 0 : i32
    return %arg0, %c0_i32, %c0_i32_0 : i32, i32, i32
  }
}

module attributes {stable_mosaic.version = 11 : i64} {
  func.func @_apply_kernel(%arg0: i32, %arg1: i32, %arg2: memref<2x4x16xf32, #tpu.memory_space<vmem>>, %arg3: memref<32x4xf32, #tpu.memory_space<vmem>>, %arg4: memref<32x1xf32, #tpu.memory_space<vmem>>, %arg5: memref<2x32x16xf32, #tpu.memory_space<vmem>>) attributes {dimension_semantics = [#tpu.dimension_semantics<parallel>, #tpu.dimension_semantics<parallel>], iteration_bounds = array<i64: 1, 1>, scalar_prefetch = 0 : i64, scratch_operands = 0 : i64, tpu.core_type = #tpu.core_type<tc>, window_params = [{transform_indices = @transform_0, window_bounds = array<i64: 2, 4, 16>}, {pipeline_mode = #tpu.pipeline_mode<synchronous>, transform_indices = @transform_1, window_bounds = array<i64: 32, 4>}, {pipeline_mode = #tpu.pipeline_mode<synchronous>, transform_indices = @transform_2, window_bounds = array<i64: 32, 1>}, {transform_indices = @transform_3, window_bounds = array<i64: 2, 32, 16>}]} {
    %c0 = arith.constant 0 : index
    %c0_0 = arith.constant 0 : index
    %0 = vector.load %arg3[%c0, %c0_0] : memref<32x4xf32, #tpu.memory_space<vmem>>, vector<32x4xf32>
    %c0_1 = arith.constant 0 : index
    %c0_2 = arith.constant 0 : index
    %1 = vector.load %arg4[%c0_1, %c0_2] : memref<32x1xf32, #tpu.memory_space<vmem>>, vector<32x1xf32>
    %c0_3 = arith.constant 0 : index
    %c0_4 = arith.constant 0 : index
    %c0_5 = arith.constant 0 : index
    %2 = vector.load %arg2[%c0_3, %c0_4, %c0_5] : memref<2x4x16xf32, #tpu.memory_space<vmem>>, vector<1x4x16xf32>
    %3 = vector.shape_cast %2 : vector<1x4x16xf32> to vector<4x16xf32>
    %cst = arith.constant dense<0.000000e+00> : vector<32x16xf32>
    %4 = tpu.matmul %0, %3, %cst {dimension_numbers = #tpu.dot_dimension_numbers<[1], [0], [0], [1], [0, 0, 1, 1], [], []>} : vector<32x4xf32>, vector<4x16xf32>, vector<32x16xf32> -> vector<32x16xf32>
    %5 = vector.broadcast %1 : vector<32x1xf32> to vector<32x16xf32>
    %6 = arith.addf %4, %5 : vector<32x16xf32>
    %cst_6 = arith.constant 0.000000e+00 : f32
    %7 = vector.broadcast %cst_6 : f32 to vector<32x16xf32>
    %8 = arith.maximumf %6, %7 : vector<32x16xf32>
    %c0_7 = arith.constant 0 : index
    %c0_8 = arith.constant 0 : index
    %c0_9 = arith.constant 0 : index
    %9 = vector.load %arg5[%c0_7, %c0_8, %c0_9] : memref<2x32x16xf32, #tpu.memory_space<vmem>>, vector<1x32x16xf32>
    %10 = vector.shape_cast %9 : vector<1x32x16xf32> to vector<32x16xf32>
    %11 = vector.shape_cast %8 : vector<32x16xf32> to vector<1x32x16xf32>
    tpu.vector_store %arg5[%c0_7, %c0_8, %c0_9], %11 {strides = array<i32>} : memref<2x32x16xf32, #tpu.memory_space<vmem>>, vector<1x32x16xf32>,
    %c1 = arith.constant 1 : index
    %c0_10 = arith.constant 0 : index
    %c0_11 = arith.constant 0 : index
    %12 = vector.load %arg2[%c1, %c0_10, %c0_11] : memref<2x4x16xf32, #tpu.memory_space<vmem>>, vector<1x4x16xf32>
    %13 = vector.shape_cast %12 : vector<1x4x16xf32> to vector<4x16xf32>
    %cst_12 = arith.constant dense<0.000000e+00> : vector<32x16xf32>
    %14 = tpu.matmul %0, %13, %cst_12 {dimension_numbers = #tpu.dot_dimension_numbers<[1], [0], [0], [1], [0, 0, 1, 1], [], []>} : vector<32x4xf32>, vector<4x16xf32>, vector<32x16xf32> -> vector<32x16xf32>
    %15 = vector.broadcast %1 : vector<32x1xf32> to vector<32x16xf32>
    %16 = arith.addf %14, %15 : vector<32x16xf32>
    %cst_13 = arith.constant 0.000000e+00 : f32
    %17 = vector.broadcast %cst_13 : f32 to vector<32x16xf32>
    %18 = arith.maximumf %16, %17 : vector<32x16xf32>
    %c1_14 = arith.constant 1 : index
    %c0_15 = arith.constant 0 : index
    %c0_16 = arith.constant 0 : index
    %19 = vector.load %arg5[%c1_14, %c0_15, %c0_16] : memref<2x32x16xf32, #tpu.memory_space<vmem>>, vector<1x32x16xf32>
    %20 = vector.shape_cast %19 : vector<1x32x16xf32> to vector<32x16xf32>
    %21 = vector.shape_cast %18 : vector<32x16xf32> to vector<1x32x16xf32>
    tpu.vector_store %arg5[%c1_14, %c0_15, %c0_16], %21 {strides = array<i32>} : memref<2x32x16xf32, #tpu.memory_space<vmem>>, vector<1x32x16xf32>,
    return
  }
  func.func @transform_0(%arg0: i32, %arg1: i32) -> (i32, i32, i32) {
    %c0_i32 = arith.constant 0 : i32
    %c0_i32_0 = arith.constant 0 : i32
    return %arg0, %c0_i32, %arg1 : i32, i32, i32
  }
  func.func @transform_1(%arg0: i32, %arg1: i32) -> (i32, i32) {
    %c0_i32 = arith.constant 0 : i32
    %c0_i32_0 = arith.constant 0 : i32
    %c0_i32_1 = arith.constant 0 : i32
    return %c0_i32, %c0_i32_0 : i32, i32
  }
  func.func @transform_2(%arg0: i32, %arg1: i32) -> (i32, i32) {
    %c0_i32 = arith.constant 0 : i32
    %c0_i32_0 = arith.constant 0 : i32
    %c0_i32_1 = arith.constant 0 : i32
    return %c0_i32, %c0_i32_0 : i32, i32
  }
  func.func @transform_3(%arg0: i32, %arg1: i32) -> (i32, i32, i32) {
    %c0_i32 = arith.constant 0 : i32
    %c0_i32_0 = arith.constant 0 : i32
    return %arg0, %c0_i32, %arg1 : i32, i32, i32
  }
}

</mosaic_0001>

<llo_original>
// kernel: mlp_block_forward.2
$region0: #{mlp_block_forward.2}
  #allocation0 [shape = 'u32[]', space=smem, size = 0x4, offset = 0x4, fixed_abs, tag = 'smem constant byte address 0x4 - core index']
  #allocation1 [shape = 'u32[144,128]{1,0:T(1,128)}', space=vmem, size = 0x12000, scoped, tag = 'internal scratch']
  %s0 = inlined_call_operand.vmem [shape: f32[2,4,16], index: 0, kind: input, shape index: {}]
  %s1 = inlined_call_operand.vmem [shape: f32[1,4,4], index: 1, kind: output, shape index: {0}]
  %s2 = inlined_call_operand.vmem [shape: f32[1,4,1], index: 2, kind: output, shape index: {1}]
  %3 = xla_tuple %s1, %s2
  %s4 = sld [smem:[#allocation0]]
  $region26: #{mlp_block_forward.2} parent=0
    _
  %s6 = ssub.s32 1, %s4
  %s7 = scalar_select 0, %s6, %s4
  // Predicated region
  $region2: #{mlp_block_forward.2} parent=0 // pred_check
    _
  $region3: #{mlp_block_forward.2} parent=0 // pred_check_branch
    %9 = sbr.rel (0) target = $region5
  $region4: #{mlp_block_forward.2} parent=0 // pred_region
    _
  $region5: #{mlp_block_forward.2} parent=0 // pred_fallthru
    _
  %p10 = scmp.eq.s32.totalorder 0, 0
  // Predicated region
  $region6: #{mlp_block_forward.2} parent=0 // pred_check
    %p11 = pneg %p10
  $region7: #{mlp_block_forward.2} parent=0 // pred_check_branch
    %13 = sbr.rel (%p11) target = $region9
  $region8: #{mlp_block_forward.2} parent=0 // pred_region
    %vm14 = vcmask 27648
    %15 = vst.msk [vmem:[%s1] sm:$0xf] %vm14, 0.0
    %vm16 = vcmask 3072
    %17 = vst.msk [vmem:[%s2] sm:$0xf] %vm16, 0.0
  $region9: #{mlp_block_forward.2} parent=0 // pred_fallthru
    _
  %v18 = vld [vmem:[%s0] sm:$0xf]
  %v19 = vld [vmem:[%s0 + $0x4] sm:$0xf]
  %vm20 = vcmask 125952
  %v21 = vsel %vm20, %v18, 0.0
  %22 = vadd.xlane.f32.xlu0 %v21
  %v23 = vpop.xlane.xlu0 %22
  %v24 = vadd.f32 %v23, 0.0
  %vm25 = vcmask 130048
  %v27 = vsel %vm25, %v19, 0
  %29 = vmatprep.subr.mxu0 0.0
  %30 = vmatpush1.xpose.msra.mxu0 %v27
  %31 = vmatprep.subr.mxu0 0.0
  %32 = vmatpush1.xpose.msra.mxu0 0.0
  %33 = vmatprep.subr.mxu0 0.0
  %34 = vmatpush1.xpose.msra.mxu0 0.0
  %35 = vmatprep.subr.mxu0 0.0
  %36 = vmatpush1.xpose.msra.mxu0 0.0
  %37 = vmatprep.subr.mxu0 0.0
  %38 = vmatpush1.xpose.msra.mxu0 0.0
  %39 = vmatprep.subr.mxu0 0.0
  %40 = vmatpush1.xpose.msra.mxu0 0.0
  %41 = vmatprep.subr.mxu0 0.0
  %42 = vmatpush1.xpose.msra.mxu0 0.0
  %43 = vmatprep.subr.mxu0 0.0
  %44 = vmatpush1.xpose.msra.mxu0 0.0
  %45 = vmatprep.subr.mxu0 0.0
  %46 = vmatpush1.xpose.msra.mxu0 0.0
  %47 = vmatprep.subr.mxu0 0.0
  %48 = vmatpush1.xpose.msra.mxu0 0.0
  %49 = vmatprep.subr.mxu0 0.0
  %50 = vmatpush1.xpose.msra.mxu0 0.0
  %51 = vmatprep.subr.mxu0 0.0
  %52 = vmatpush1.xpose.msra.mxu0 0.0
  %53 = vmatprep.subr.mxu0 0.0
  %54 = vmatpush1.xpose.msra.mxu0 0.0
  %55 = vmatprep.subr.mxu0 0.0
  %56 = vmatpush1.xpose.msra.mxu0 0.0
  %57 = vmatprep.subr.mxu0 0.0
  %58 = vmatpush1.xpose.msra.mxu0 0.0
  %59 = vmatprep.subr.mxu0 0.0
  %60 = vmatpush1.xpose.msra.mxu0 0.0
  %61 = vmatprep.subr.mxu0 0.0
  %62 = vmatpush1.xpose.msra.mxu0 0.0
  %63 = vmatprep.subr.mxu0 0.0
  %64 = vmatpush1.xpose.msra.mxu0 0.0
  %65 = vmatprep.subr.mxu0 0.0
  %66 = vmatpush1.xpose.msra.mxu0 0.0
  %67 = vmatprep.subr.mxu0 0.0
  %68 = vmatpush1.xpose.msra.mxu0 0.0
  %69 = vmatprep.subr.mxu0 0.0
  %70 = vmatpush1.xpose.msra.mxu0 0.0
  %71 = vmatprep.subr.mxu0 0.0
  %72 = vmatpush1.xpose.msra.mxu0 0.0
  %73 = vmatprep.subr.mxu0 0.0
  %74 = vmatpush1.xpose.msra.mxu0 0.0
  %75 = vmatprep.subr.mxu0 0.0
  %76 = vmatpush1.xpose.msra.mxu0 0.0
  %77 = vmatprep.subr.mxu0 0.0
  %78 = vmatpush1.xpose.msra.mxu0 0.0
  %79 = vmatprep.subr.mxu0 0.0
  %80 = vmatpush1.xpose.msra.mxu0 0.0
  %81 = vmatprep.subr.mxu0 0.0
  %82 = vmatpush1.xpose.msra.mxu0 0.0
  %83 = vmatprep.subr.mxu0 0.0
  %84 = vmatpush1.xpose.msra.mxu0 0.0
  %85 = vmatprep.subr.mxu0 0.0
  %86 = vmatpush1.xpose.msra.mxu0 0.0
  %87 = vmatprep.subr.mxu0 0.0
  %88 = vmatpush1.xpose.msra.mxu0 0.0
  %89 = vmatprep.subr.mxu0 0.0
  %90 = vmatpush1.xpose.msra.mxu0 0.0
  %91 = vmatprep.subr.mxu0 0.0
  %92 = vmatpush1.xpose.msra.mxu0 0.0
  %93 = vmatprep.mubr.f32.mxu0 0.0
  %94 = vmatmul.mubr.f32.gmra.mrb[0].mxu0 %v27
  %v95 = vpop.f32.mrb[0].mxu0
  %v96 = vadd.f32 0.0, %v95
  %v97 = vpop.f32.mrb[0].mxu0
  %98 = vdwg.mxu0
  %v100 = vsel %vm25, %v18, 0
  %102 = vmatprep.subr.mxu0 0.0
  %103 = vmatpush1.xpose.msra.mxu0 %v100
  %104 = vmatprep.subr.mxu0 0.0
  %105 = vmatpush1.xpose.msra.mxu0 0.0
  %106 = vmatprep.subr.mxu0 0.0
  %107 = vmatpush1.xpose.msra.mxu0 0.0
  %108 = vmatprep.subr.mxu0 0.0
  %109 = vmatpush1.xpose.msra.mxu0 0.0
  %110 = vmatprep.subr.mxu0 0.0
  %111 = vmatpush1.xpose.msra.mxu0 0.0
  %112 = vmatprep.subr.mxu0 0.0
  %113 = vmatpush1.xpose.msra.mxu0 0.0
  %114 = vmatprep.subr.mxu0 0.0
  %115 = vmatpush1.xpose.msra.mxu0 0.0
  %116 = vmatprep.subr.mxu0 0.0
  %117 = vmatpush1.xpose.msra.mxu0 0.0
  %118 = vmatprep.subr.mxu0 0.0
  %119 = vmatpush1.xpose.msra.mxu0 0.0
  %120 = vmatprep.subr.mxu0 0.0
  %121 = vmatpush1.xpose.msra.mxu0 0.0
  %122 = vmatprep.subr.mxu0 0.0
  %123 = vmatpush1.xpose.msra.mxu0 0.0
  %124 = vmatprep.subr.mxu0 0.0
  %125 = vmatpush1.xpose.msra.mxu0 0.0
  %126 = vmatprep.subr.mxu0 0.0
  %127 = vmatpush1.xpose.msra.mxu0 0.0
  %128 = vmatprep.subr.mxu0 0.0
  %129 = vmatpush1.xpose.msra.mxu0 0.0
  %130 = vmatprep.subr.mxu0 0.0
  %131 = vmatpush1.xpose.msra.mxu0 0.0
  %132 = vmatprep.subr.mxu0 0.0
  %133 = vmatpush1.xpose.msra.mxu0 0.0
  %134 = vmatprep.subr.mxu0 0.0
  %135 = vmatpush1.xpose.msra.mxu0 0.0
  %136 = vmatprep.subr.mxu0 0.0
  %137 = vmatpush1.xpose.msra.mxu0 0.0
  %138 = vmatprep.subr.mxu0 0.0
  %139 = vmatpush1.xpose.msra.mxu0 0.0
  %140 = vmatprep.subr.mxu0 0.0
  %141 = vmatpush1.xpose.msra.mxu0 0.0
  %142 = vmatprep.subr.mxu0 0.0
  %143 = vmatpush1.xpose.msra.mxu0 0.0
  %144 = vmatprep.subr.mxu0 0.0
  %145 = vmatpush1.xpose.msra.mxu0 0.0
  %146 = vmatprep.subr.mxu0 0.0
  %147 = vmatpush1.xpose.msra.mxu0 0.0
  %148 = vmatprep.subr.mxu0 0.0
  %149 = vmatpush1.xpose.msra.mxu0 0.0
  %150 = vmatprep.subr.mxu0 0.0
  %151 = vmatpush1.xpose.msra.mxu0 0.0
  %152 = vmatprep.subr.mxu0 0.0
  %153 = vmatpush1.xpose.msra.mxu0 0.0
  %154 = vmatprep.subr.mxu0 0.0
  %155 = vmatpush1.xpose.msra.mxu0 0.0
  %156 = vmatprep.subr.mxu0 0.0
  %157 = vmatpush1.xpose.msra.mxu0 0.0
  %158 = vmatprep.subr.mxu0 0.0
  %159 = vmatpush1.xpose.msra.mxu0 0.0
  %160 = vmatprep.subr.mxu0 0.0
  %161 = vmatpush1.xpose.msra.mxu0 0.0
  %162 = vmatprep.subr.mxu0 0.0
  %163 = vmatpush1.xpose.msra.mxu0 0.0
  %164 = vmatprep.subr.mxu0 0.0
  %165 = vmatpush1.xpose.msra.mxu0 0.0
  %166 = vmatprep.mubr.f32.mxu0 0.0
  %167 = vmatmul.mubr.f32.gmra.mrb[0].mxu0 %v100
  %v168 = vpop.f32.mrb[0].mxu0
  %v169 = vadd.f32 %v96, %v168
  %v170 = vpop.f32.mrb[0].mxu0
  %171 = vdwg.mxu0
  %v172 = vsel %vm20, %v19, 0.0
  %173 = vadd.xlane.f32.xlu0 %v172
  %v174 = vpop.xlane.xlu0 %173
  %v175 = vadd.f32 %v24, %v174
  %v176 = vld [vmem:[%s1] sm:$0xf]
  %v177 = vadd.f32 %v176, %v169
  %vm178 = vcmask 27648
  %179 = vst.msk [vmem:[%s1] sm:$0xf] %vm178, %v177
  %v180 = vld [vmem:[%s2] sm:$0xf]
  %v181 = vadd.f32 %v180, %v175
  %vm182 = vcmask 3072
  %183 = vst.msk [vmem:[%s2] sm:$0xf] %vm182, %v181
  // Predicated region
  $region10: #{mlp_block_forward.2} parent=0 // pred_check
    _
  $region11: #{mlp_block_forward.2} parent=0 // pred_check_branch
    %185 = sbr.rel (0) target = $region13
  $region12: #{mlp_block_forward.2} parent=0 // pred_region
    _
  $region13: #{mlp_block_forward.2} parent=0 // pred_fallthru
    _
  // Predicated region
  $region14: #{mlp_block_forward.2} parent=0 // pred_check
    _
  $region15: #{mlp_block_forward.2} parent=0 // pred_check_branch
    %187 = sbr.rel (0) target = $region17
  $region16: #{mlp_block_forward.2} parent=0 // pred_region
    _
  $region17: #{mlp_block_forward.2} parent=0 // pred_fallthru
    _
  // Predicated region
  $region18: #{mlp_block_forward.2} parent=0 // pred_check
    _
  $region19: #{mlp_block_forward.2} parent=0 // pred_check_branch
    %189 = sbr.rel (0) target = $region21
  $region20: #{mlp_block_forward.2} parent=0 // pred_region
    _
  $region21: #{mlp_block_forward.2} parent=0 // pred_fallthru
    _
  // Predicated region
  $region22: #{mlp_block_forward.2} parent=0 // pred_check
    _
  $region23: #{mlp_block_forward.2} parent=0 // pred_check_branch
    %191 = sbr.rel (0) target = $region25
  $region24: #{mlp_block_forward.2} parent=0 // pred_region
    _
  $region25: #{mlp_block_forward.2} parent=0 // pred_fallthru
    _

// kernel: mlp_block_forward.3
$region0: #{mlp_block_forward.3}
  #allocation0 [shape = 'u32[]', space=smem, size = 0x4, offset = 0x4, fixed_abs, tag = 'smem constant byte address 0x4 - core index']
  #allocation1 [shape = 'u32[144,128]{1,0:T(1,128)}', space=vmem, size = 0x12000, scoped, tag = 'internal scratch']
  %s0 = inlined_call_operand.vmem [shape: f32[2,4,16], index: 0, kind: input, shape index: {}]
  %s1 = inlined_call_operand.vmem [shape: f32[32,4], index: 1, kind: input, shape index: {}]
  %s2 = inlined_call_operand.vmem [shape: f32[32,1], index: 2, kind: input, shape index: {}]
  %s3 = inlined_call_operand.vmem [shape: f32[2,32,16], index: 3, kind: output, shape index: {}]
  %s4 = sld [smem:[#allocation0]]
  $region22: #{mlp_block_forward.3} parent=0
    _
  %s6 = ssub.s32 1, %s4
  %s7 = scalar_select 0, %s6, %s4
  // Predicated region
  $region2: #{mlp_block_forward.3} parent=0 // pred_check
    _
  $region3: #{mlp_block_forward.3} parent=0 // pred_check_branch
    %9 = sbr.rel (0) target = $region5
  $region4: #{mlp_block_forward.3} parent=0 // pred_region
    _
  $region5: #{mlp_block_forward.3} parent=0 // pred_fallthru
    _
  // Predicated region
  $region6: #{mlp_block_forward.3} parent=0 // pred_check
    _
  $region7: #{mlp_block_forward.3} parent=0 // pred_check_branch
    %11 = sbr.rel (0) target = $region9
  $region8: #{mlp_block_forward.3} parent=0 // pred_region
    _
  $region9: #{mlp_block_forward.3} parent=0 // pred_fallthru
    _
  // Predicated region
  $region10: #{mlp_block_forward.3} parent=0 // pred_check
    _
  $region11: #{mlp_block_forward.3} parent=0 // pred_check_branch
    %13 = sbr.rel (0) target = $region13
  $region12: #{mlp_block_forward.3} parent=0 // pred_region
    _
  $region13: #{mlp_block_forward.3} parent=0 // pred_fallthru
    _
  %v14 = vld [vmem:[%s1] sm:$0xff]
  %v15 = vld [vmem:[%s1 + $0x8] sm:$0xff]
  %v16 = vld [vmem:[%s1 + $0x10] sm:$0xff]
  %v17 = vld [vmem:[%s1 + $0x18] sm:$0xff]
  %v18 = vld [vmem:[%s2] sm:$0xff]
  %v19 = vld [vmem:[%s2 + $0x8] sm:$0xff]
  %v20 = vld [vmem:[%s2 + $0x10] sm:$0xff]
  %v21 = vld [vmem:[%s2 + $0x18] sm:$0xff]
  %v22 = vld [vmem:[%s0] sm:$0xf]
  %24 = vset.pattern.permute.xlu0 0
  %25 = vperm.xlu0 %24, %v18
  %v26 = vpop.permute.xlu0 %25
  %29 = vset.pattern.permute.xlu0 0
  %30 = vperm.xlu0 %29, %v19
  %v31 = vpop.permute.xlu0 %30
  %34 = vset.pattern.permute.xlu0 0
  %35 = vperm.xlu0 %34, %v20
  %v36 = vpop.permute.xlu0 %35
  %39 = vset.pattern.permute.xlu0 0
  %40 = vperm.xlu0 %39, %v21
  %v41 = vpop.permute.xlu0 %40
  %vm43 = vcmask 31744
  %v45 = vsel %vm43, %v14, 0
  %v48 = vsel %vm43, %v15, 0
  %v51 = vsel %vm43, %v16, 0
  %v54 = vsel %vm43, %v17, 0
  %vm56 = vcmask 1043456
  %v58 = vsel %vm56, %v22, 0
  %60 = vmatprep.subr.mxu0 0.0
  %61 = vmatpush1.msra.mxu0 %v58
  %62 = vmatprep.subr.mxu0 0.0
  %63 = vmatpush1.msra.mxu0 0.0
  %64 = vmatprep.subr.mxu0 0.0
  %65 = vmatpush1.msra.mxu0 0.0
  %66 = vmatprep.subr.mxu0 0.0
  %67 = vmatpush1.msra.mxu0 0.0
  %68 = vmatprep.subr.mxu0 0.0
  %69 = vmatpush1.msra.mxu0 0.0
  %70 = vmatprep.subr.mxu0 0.0
  %71 = vmatpush1.msra.mxu0 0.0
  %72 = vmatprep.subr.mxu0 0.0
  %73 = vmatpush1.msra.mxu0 0.0
  %74 = vmatprep.subr.mxu0 0.0
  %75 = vmatpush1.msra.mxu0 0.0
  %76 = vmatprep.subr.mxu0 0.0
  %77 = vmatpush1.msra.mxu0 0.0
  %78 = vmatprep.subr.mxu0 0.0
  %79 = vmatpush1.msra.mxu0 0.0
  %80 = vmatprep.subr.mxu0 0.0
  %81 = vmatpush1.msra.mxu0 0.0
  %82 = vmatprep.subr.mxu0 0.0
  %83 = vmatpush1.msra.mxu0 0.0
  %84 = vmatprep.subr.mxu0 0.0
  %85 = vmatpush1.msra.mxu0 0.0
  %86 = vmatprep.subr.mxu0 0.0
  %87 = vmatpush1.msra.mxu0 0.0
  %88 = vmatprep.subr.mxu0 0.0
  %89 = vmatpush1.msra.mxu0 0.0
  %90 = vmatprep.subr.mxu0 0.0
  %91 = vmatpush1.msra.mxu0 0.0
  %92 = vmatprep.subr.mxu0 0.0
  %93 = vmatpush1.msra.mxu0 0.0
  %94 = vmatprep.subr.mxu0 0.0
  %95 = vmatpush1.msra.mxu0 0.0
  %96 = vmatprep.subr.mxu0 0.0
  %97 = vmatpush1.msra.mxu0 0.0
  %98 = vmatprep.subr.mxu0 0.0
  %99 = vmatpush1.msra.mxu0 0.0
  %100 = vmatprep.subr.mxu0 0.0
  %101 = vmatpush1.msra.mxu0 0.0
  %102 = vmatprep.subr.mxu0 0.0
  %103 = vmatpush1.msra.mxu0 0.0
  %104 = vmatprep.subr.mxu0 0.0
  %105 = vmatpush1.msra.mxu0 0.0
  %106 = vmatprep.subr.mxu0 0.0
  %107 = vmatpush1.msra.mxu0 0.0
  %108 = vmatprep.subr.mxu0 0.0
  %109 = vmatpush1.msra.mxu0 0.0
  %110 = vmatprep.subr.mxu0 0.0
  %111 = vmatpush1.msra.mxu0 0.0
  %112 = vmatprep.subr.mxu0 0.0
  %113 = vmatpush1.msra.mxu0 0.0
  %114 = vmatprep.subr.mxu0 0.0
  %115 = vmatpush1.msra.mxu0 0.0
  %116 = vmatprep.subr.mxu0 0.0
  %117 = vmatpush1.msra.mxu0 0.0
  %118 = vmatprep.subr.mxu0 0.0
  %119 = vmatpush1.msra.mxu0 0.0
  %120 = vmatprep.subr.mxu0 0.0
  %121 = vmatpush1.msra.mxu0 0.0
  %122 = vmatprep.subr.mxu0 0.0
  %123 = vmatpush1.msra.mxu0 0.0
  %124 = vmatprep.mubr.f32.mxu0 0.0
  %125 = vmatmul.mubr.f32.gmra.mrb[0].mxu0 %v45
  %v126 = vpop.f32.mrb[0].mxu0
  %v127 = vadd.f32 %v26, %v126
  %v128 = vpop.f32.mrb[0].mxu0
  %129 = vmatprep.mubr.f32.mxu0 0.0
  %130 = vmatmul.mubr.f32.gmra.mrb[0].mxu0 %v48
  %v131 = vpop.f32.mrb[0].mxu0
  %v132 = vadd.f32 %v31, %v131
  %v133 = vpop.f32.mrb[0].mxu0
  %134 = vmatprep.mubr.f32.mxu0 0.0
  %135 = vmatmul.mubr.f32.gmra.mrb[0].mxu0 %v51
  %v136 = vpop.f32.mrb[0].mxu0
  %v137 = vadd.f32 %v36, %v136
  %v138 = vpop.f32.mrb[0].mxu0
  %139 = vmatprep.mubr.f32.mxu0 0.0
  %140 = vmatmul.mubr.f32.gmra.mrb[0].mxu0 %v54
  %v141 = vpop.f32.mrb[0].mxu0
  %v142 = vadd.f32 %v41, %v141
  %v143 = vpop.f32.mrb[0].mxu0
  %144 = vdwg.mxu0
  %v145 = vmax.f32 %v127, 0.0
  %v146 = vmax.f32 %v132, 0.0
  %v147 = vmax.f32 %v137, 0.0
  %v148 = vmax.f32 %v142, 0.0
  %vm149 = vcmask 130048
  %150 = vst.msk [vmem:[%s3] sm:$0xff] %vm149, %v145
  %151 = vst.msk [vmem:[%s3 + $0x8] sm:$0xff] %vm149, %v146
  %152 = vst.msk [vmem:[%s3 + $0x10] sm:$0xff] %vm149, %v147
  %153 = vst.msk [vmem:[%s3 + $0x18] sm:$0xff] %vm149, %v148
  %s154 = scalar_lea.vmem %s0, 4
  %v155 = vld [vmem:[%s154] sm:$0xf]
  %v157 = vsel %vm56, %v155, 0
  %159 = vmatprep.subr.mxu0 0.0
  %160 = vmatpush1.msra.mxu0 %v157
  %161 = vmatprep.subr.mxu0 0.0
  %162 = vmatpush1.msra.mxu0 0.0
  %163 = vmatprep.subr.mxu0 0.0
  %164 = vmatpush1.msra.mxu0 0.0
  %165 = vmatprep.subr.mxu0 0.0
  %166 = vmatpush1.msra.mxu0 0.0
  %167 = vmatprep.subr.mxu0 0.0
  %168 = vmatpush1.msra.mxu0 0.0
  %169 = vmatprep.subr.mxu0 0.0
  %170 = vmatpush1.msra.mxu0 0.0
  %171 = vmatprep.subr.mxu0 0.0
  %172 = vmatpush1.msra.mxu0 0.0
  %173 = vmatprep.subr.mxu0 0.0
  %174 = vmatpush1.msra.mxu0 0.0
  %175 = vmatprep.subr.mxu0 0.0
  %176 = vmatpush1.msra.mxu0 0.0
  %177 = vmatprep.subr.mxu0 0.0
  %178 = vmatpush1.msra.mxu0 0.0
  %179 = vmatprep.subr.mxu0 0.0
  %180 = vmatpush1.msra.mxu0 0.0
  %181 = vmatprep.subr.mxu0 0.0
  %182 = vmatpush1.msra.mxu0 0.0
  %183 = vmatprep.subr.mxu0 0.0
  %184 = vmatpush1.msra.mxu0 0.0
  %185 = vmatprep.subr.mxu0 0.0
  %186 = vmatpush1.msra.mxu0 0.0
  %187 = vmatprep.subr.mxu0 0.0
  %188 = vmatpush1.msra.mxu0 0.0
  %189 = vmatprep.subr.mxu0 0.0
  %190 = vmatpush1.msra.mxu0 0.0
  %191 = vmatprep.subr.mxu0 0.0
  %192 = vmatpush1.msra.mxu0 0.0
  %193 = vmatprep.subr.mxu0 0.0
  %194 = vmatpush1.msra.mxu0 0.0
  %195 = vmatprep.subr.mxu0 0.0
  %196 = vmatpush1.msra.mxu0 0.0
  %197 = vmatprep.subr.mxu0 0.0
  %198 = vmatpush1.msra.mxu0 0.0
  %199 = vmatprep.subr.mxu0 0.0
  %200 = vmatpush1.msra.mxu0 0.0
  %201 = vmatprep.subr.mxu0 0.0
  %202 = vmatpush1.msra.mxu0 0.0
  %203 = vmatprep.subr.mxu0 0.0
  %204 = vmatpush1.msra.mxu0 0.0
  %205 = vmatprep.subr.mxu0 0.0
  %206 = vmatpush1.msra.mxu0 0.0
  %207 = vmatprep.subr.mxu0 0.0
  %208 = vmatpush1.msra.mxu0 0.0
  %209 = vmatprep.subr.mxu0 0.0
  %210 = vmatpush1.msra.mxu0 0.0
  %211 = vmatprep.subr.mxu0 0.0
  %212 = vmatpush1.msra.mxu0 0.0
  %213 = vmatprep.subr.mxu0 0.0
  %214 = vmatpush1.msra.mxu0 0.0
  %215 = vmatprep.subr.mxu0 0.0
  %216 = vmatpush1.msra.mxu0 0.0
  %217 = vmatprep.subr.mxu0 0.0
  %218 = vmatpush1.msra.mxu0 0.0
  %219 = vmatprep.subr.mxu0 0.0
  %220 = vmatpush1.msra.mxu0 0.0
  %221 = vmatprep.subr.mxu0 0.0
  %222 = vmatpush1.msra.mxu0 0.0
  %223 = vmatprep.mubr.f32.mxu0 0.0
  %224 = vmatmul.mubr.f32.gmra.mrb[0].mxu0 %v45
  %v225 = vpop.f32.mrb[0].mxu0
  %v226 = vadd.f32 %v26, %v225
  %v227 = vpop.f32.mrb[0].mxu0
  %228 = vmatprep.mubr.f32.mxu0 0.0
  %229 = vmatmul.mubr.f32.gmra.mrb[0].mxu0 %v48
  %v230 = vpop.f32.mrb[0].mxu0
  %v231 = vadd.f32 %v31, %v230
  %v232 = vpop.f32.mrb[0].mxu0
  %233 = vmatprep.mubr.f32.mxu0 0.0
  %234 = vmatmul.mubr.f32.gmra.mrb[0].mxu0 %v51
  %v235 = vpop.f32.mrb[0].mxu0
  %v236 = vadd.f32 %v36, %v235
  %v237 = vpop.f32.mrb[0].mxu0
  %238 = vmatprep.mubr.f32.mxu0 0.0
  %239 = vmatmul.mubr.f32.gmra.mrb[0].mxu0 %v54
  %v240 = vpop.f32.mrb[0].mxu0
  %v241 = vadd.f32 %v41, %v240
  %v242 = vpop.f32.mrb[0].mxu0
  %243 = vdwg.mxu0
  %v244 = vmax.f32 %v226, 0.0
  %v245 = vmax.f32 %v231, 0.0
  %v246 = vmax.f32 %v236, 0.0
  %v247 = vmax.f32 %v241, 0.0
  %s248 = scalar_lea.vmem %s3, 32
  %249 = vst.msk [vmem:[%s248] sm:$0xff] %vm149, %v244
  %250 = vst.msk [vmem:[%s248 + $0x8] sm:$0xff] %vm149, %v245
  %251 = vst.msk [vmem:[%s248 + $0x10] sm:$0xff] %vm149, %v246
  %252 = vst.msk [vmem:[%s248 + $0x18] sm:$0xff] %vm149, %v247
  // Predicated region
  $region14: #{mlp_block_forward.3} parent=0 // pred_check
    _
  $region15: #{mlp_block_forward.3} parent=0 // pred_check_branch
    %254 = sbr.rel (0) target = $region17
  $region16: #{mlp_block_forward.3} parent=0 // pred_region
    _
  $region17: #{mlp_block_forward.3} parent=0 // pred_fallthru
    _
  // Predicated region
  $region18: #{mlp_block_forward.3} parent=0 // pred_check
    _
  $region19: #{mlp_block_forward.3} parent=0 // pred_check_branch
    %256 = sbr.rel (0) target = $region21
  $region20: #{mlp_block_forward.3} parent=0 // pred_region
    _
  $region21: #{mlp_block_forward.3} parent=0 // pred_fallthru
    _

</llo_original>
